<compile_context>
chip_gen: v5e
topology: v5e:2x2
jax: 0.10.0
libtpu: 0.0.40
codegen_flags: <defaults>
</compile_context>

<pallas_src>
import math

import jax
import jax.numpy as jnp
from jax.experimental import pallas as pl
from jax.experimental.pallas import tpu as pltpu


def _round_up(a, b):
    return (a + b - 1) // b * b


def _xavier_uniform(key, fan_out, fan_in, dtype=jnp.float32):
    # Matches torch.nn.init.xavier_uniform_ on a (fan_out, fan_in) weight.
    bound = math.sqrt(6.0 / (fan_in + fan_out))
    return jax.random.uniform(key, (fan_out, fan_in), dtype=dtype, minval=-bound, maxval=bound)


def _mlp_kernel(x_ref, w1_ref, b1_ref, w2_ref, b2_ref, o_ref):
    # x_ref:  [TM, D_in]   (bf16)   w1_ref: [D_in, H]   (bf16)   b1_ref: [1, H]     (f32)
    # w2_ref: [H, D_pad]   (f32)    b2_ref: [1, D_pad]  (f32)    o_ref:  [TM, D_pad] (f32)
    h = jnp.dot(x_ref[...], w1_ref[...], preferred_element_type=jnp.float32)
    h = jnp.maximum(h + b1_ref[...], 0.0)                 # ReLU (default hidden_activation)
    out = jnp.dot(h, w2_ref[...], preferred_element_type=jnp.float32) + b2_ref[...]
    o_ref[...] = out.astype(o_ref.dtype)


def mlp_forward(x, w1, b1, w2, b2, *, tm=1024):
    """x: [..., D_in] -> [..., D_out].

    w1: [D_in, H], b1: [1, H], w2: [H, D_out], b2: [1, D_out]  (torch Linear weights transposed).
    """
    orig_dtype = x.dtype
    d_in = x.shape[-1]
    hidden = w1.shape[-1]
    d_out = w2.shape[-1]
    lead = x.shape[:-1]

    m = 1
    for s in lead:
        m *= s

    # Row tiling: largest tile <= tm; rows padded up to a multiple of the tile (and of 8 sublanes).
    tm_eff = min(tm, _round_up(m, 8))
    m_pad = _round_up(m, tm_eff)
    # Lane-dense output: pad D_out up to a multiple of 128 so output stores use full lanes.
    d_pad = _round_up(d_out, 128)

    x2d = x.reshape(m, d_in).astype(jnp.bfloat16)          # bf16 input halves HBM read traffic
    if m_pad != m:
        x2d = jnp.pad(x2d, ((0, m_pad - m), (0, 0)))
    w1b = w1.astype(jnp.bfloat16)
    b1f = b1.astype(jnp.float32).reshape(1, hidden)
    w2p = jnp.pad(w2.astype(jnp.float32), ((0, 0), (0, d_pad - d_out)))
    b2p = jnp.pad(b2.astype(jnp.float32).reshape(1, d_out), ((0, 0), (0, d_pad - d_out)))

    n_tiles = m_pad // tm_eff

    out_padded = pl.pallas_call(
        _mlp_kernel,
        out_shape=jax.ShapeDtypeStruct((m_pad, d_pad), jnp.float32),
        grid=(n_tiles,),
        in_specs=[
            pl.BlockSpec((tm_eff, d_in), lambda i: (i, 0)),    # x: streamed row tile (pipelined)
            pl.BlockSpec((d_in, hidden), lambda i: (0, 0)),    # w1: VMEM-resident
            pl.BlockSpec((1, hidden), lambda i: (0, 0)),       # b1: VMEM-resident
            pl.BlockSpec((hidden, d_pad), lambda i: (0, 0)),   # w2 (lane-padded): VMEM-resident
            pl.BlockSpec((1, d_pad), lambda i: (0, 0)),        # b2 (lane-padded): VMEM-resident
        ],
        out_specs=pl.BlockSpec((tm_eff, d_pad), lambda i: (i, 0)),
        compiler_params=pltpu.CompilerParams(
            dimension_semantics=("parallel",),                 # megacore sharding on v7x
            vmem_limit_bytes=32 * 1024 * 1024,                 # explicit, portable across v5e/v6e/v7x
        ),
    )(x2d, w1b, b1f, w2p, b2p)

    out2d = out_padded[:m, :d_out].astype(orig_dtype)
    return out2d.reshape(*lead, d_out)


if __name__ == "__main__":
    # Default MLP config: input_size=32, num_hidden_layers=1, hidden_layer_size=128,
    # hidden_activation=ReLU, output_size=1, biases init to 0, xavier-uniform weights.
    INPUT_SIZE = 32
    HIDDEN = 128
    OUTPUT_SIZE = 1

    key = jax.random.PRNGKey(0)
    k_x, k_w1, k_w2 = jax.random.split(key, 3)

    # Input: (batch=2, seq=8, input_size=32); only the last dim matters for the MLP.
    x = jax.random.normal(k_x, (2, 8, INPUT_SIZE), dtype=jnp.float32)

    # Parameters (deterministic): torch stores Linear weight as (out, in); we keep (in, out).
    w1 = _xavier_uniform(k_w1, HIDDEN, INPUT_SIZE).T         # [D_in, H]
    b1 = jnp.zeros((1, HIDDEN), dtype=jnp.float32)           # [1, H]
    w2 = _xavier_uniform(k_w2, OUTPUT_SIZE, HIDDEN).T        # [H, D_out]
    b2 = jnp.zeros((1, OUTPUT_SIZE), dtype=jnp.float32)      # [1, D_out]

    out = mlp_forward(x, w1, b1, w2, b2)
    out = jax.block_until_ready(out)
    assert out.shape == (2, 8, OUTPUT_SIZE)

    # Reference in plain JAX, with the same bf16 quantization of x / w1 as the kernel uses.
    xq = x.reshape(-1, INPUT_SIZE).astype(jnp.bfloat16).astype(jnp.float32)
    w1q = w1.astype(jnp.bfloat16).astype(jnp.float32)
    ref = jnp.maximum(xq @ w1q + b1, 0.0) @ w2 + b2
    ref = ref.reshape(2, 8, OUTPUT_SIZE)
    assert jnp.allclose(out, ref, atol=1e-3, rtol=1e-3), float(jnp.max(jnp.abs(out - ref)))

    print("KERNEL_OK")
</pallas_src>

<mosaic_0001>
module attributes {stable_mosaic.version = 11 : i64} {
  func.func @_mlp_kernel(%arg0: i32, %arg1: memref<16x32xbf16, #tpu.memory_space<vmem>>, %arg2: memref<32x128xbf16, #tpu.memory_space<vmem>>, %arg3: memref<1x128xf32, #tpu.memory_space<vmem>>, %arg4: memref<128x128xf32, #tpu.memory_space<vmem>>, %arg5: memref<1x128xf32, #tpu.memory_space<vmem>>, %arg6: memref<16x128xf32, #tpu.memory_space<vmem>>) attributes {dimension_semantics = [#tpu.dimension_semantics<parallel>], iteration_bounds = array<i64: 1>, scalar_prefetch = 0 : i64, scratch_operands = 0 : i64, tpu.core_type = #tpu.core_type<tc>, window_params = [{transform_indices = @transform_0, window_bounds = array<i64: 16, 32>}, {pipeline_mode = #tpu.pipeline_mode<synchronous>, transform_indices = @transform_1, window_bounds = array<i64: 32, 128>}, {pipeline_mode = #tpu.pipeline_mode<synchronous>, transform_indices = @transform_2, window_bounds = array<i64: 1, 128>}, {pipeline_mode = #tpu.pipeline_mode<synchronous>, transform_indices = @transform_3, window_bounds = array<i64: 128, 128>}, {pipeline_mode = #tpu.pipeline_mode<synchronous>, transform_indices = @transform_4, window_bounds = array<i64: 1, 128>}, {transform_indices = @transform_5, window_bounds = array<i64: 16, 128>}]} {
    %c0 = arith.constant 0 : index
    %c0_0 = arith.constant 0 : index
    %0 = vector.load %arg1[%c0, %c0_0] : memref<16x32xbf16, #tpu.memory_space<vmem>>, vector<16x32xbf16>
    %c0_1 = arith.constant 0 : index
    %c0_2 = arith.constant 0 : index
    %1 = vector.load %arg2[%c0_1, %c0_2] : memref<32x128xbf16, #tpu.memory_space<vmem>>, vector<32x128xbf16>
    %cst = arith.constant dense<0.000000e+00> : vector<16x128xf32>
    %2 = tpu.matmul %0, %1, %cst {dimension_numbers = #tpu.dot_dimension_numbers<[1], [0], [0], [1], [0, 0, 1, 1], [], []>} : vector<16x32xbf16>, vector<32x128xbf16>, vector<16x128xf32> -> vector<16x128xf32>
    %c0_3 = arith.constant 0 : index
    %c0_4 = arith.constant 0 : index
    %3 = vector.load %arg3[%c0_3, %c0_4] : memref<1x128xf32, #tpu.memory_space<vmem>>, vector<1x128xf32>
    %4 = vector.broadcast %3 : vector<1x128xf32> to vector<16x128xf32>
    %5 = arith.addf %2, %4 : vector<16x128xf32>
    %cst_5 = arith.constant 0.000000e+00 : f32
    %6 = vector.broadcast %cst_5 : f32 to vector<16x128xf32>
    %7 = arith.maximumf %5, %6 : vector<16x128xf32>
    %c0_6 = arith.constant 0 : index
    %c0_7 = arith.constant 0 : index
    %8 = vector.load %arg4[%c0_6, %c0_7] : memref<128x128xf32, #tpu.memory_space<vmem>>, vector<128x128xf32>
    %cst_8 = arith.constant dense<0.000000e+00> : vector<16x128xf32>
    %9 = tpu.matmul %7, %8, %cst_8 {dimension_numbers = #tpu.dot_dimension_numbers<[1], [0], [0], [1], [0, 0, 1, 1], [], []>} : vector<16x128xf32>, vector<128x128xf32>, vector<16x128xf32> -> vector<16x128xf32>
    %c0_9 = arith.constant 0 : index
    %c0_10 = arith.constant 0 : index
    %10 = vector.load %arg5[%c0_9, %c0_10] : memref<1x128xf32, #tpu.memory_space<vmem>>, vector<1x128xf32>
    %11 = vector.broadcast %10 : vector<1x128xf32> to vector<16x128xf32>
    %12 = arith.addf %9, %11 : vector<16x128xf32>
    %c0_11 = arith.constant 0 : index
    %c0_12 = arith.constant 0 : index
    %13 = vector.load %arg6[%c0_11, %c0_12] : memref<16x128xf32, #tpu.memory_space<vmem>>, vector<16x128xf32>
    tpu.vector_store %arg6[%c0_11, %c0_12], %12 {strides = array<i32>} : memref<16x128xf32, #tpu.memory_space<vmem>>, vector<16x128xf32>,
    return
  }
  func.func @transform_0(%arg0: i32) -> (i32, i32) {
    %c0_i32 = arith.constant 0 : i32
    %c0_i32_0 = arith.constant 0 : i32
    return %arg0, %c0_i32 : i32, i32
  }
  func.func @transform_1(%arg0: i32) -> (i32, i32) {
    %c0_i32 = arith.constant 0 : i32
    %c0_i32_0 = arith.constant 0 : i32
    %c0_i32_1 = arith.constant 0 : i32
    return %c0_i32, %c0_i32_0 : i32, i32
  }
  func.func @transform_2(%arg0: i32) -> (i32, i32) {
    %c0_i32 = arith.constant 0 : i32
    %c0_i32_0 = arith.constant 0 : i32
    %c0_i32_1 = arith.constant 0 : i32
    return %c0_i32, %c0_i32_0 : i32, i32
  }
  func.func @transform_3(%arg0: i32) -> (i32, i32) {
    %c0_i32 = arith.constant 0 : i32
    %c0_i32_0 = arith.constant 0 : i32
    %c0_i32_1 = arith.constant 0 : i32
    return %c0_i32, %c0_i32_0 : i32, i32
  }
  func.func @transform_4(%arg0: i32) -> (i32, i32) {
    %c0_i32 = arith.constant 0 : i32
    %c0_i32_0 = arith.constant 0 : i32
    %c0_i32_1 = arith.constant 0 : i32
    return %c0_i32, %c0_i32_0 : i32, i32
  }
  func.func @transform_5(%arg0: i32) -> (i32, i32) {
    %c0_i32 = arith.constant 0 : i32
    %c0_i32_0 = arith.constant 0 : i32
    return %arg0, %c0_i32 : i32, i32
  }
}

</mosaic_0001>

<llo_original>
// kernel: tpu_custom_call.1
$region0: #{tpu_custom_call.1}
  #allocation0 [shape = 'u32[]', space=smem, size = 0x4, offset = 0x4, fixed_abs, tag = 'smem constant byte address 0x4 - core index']
  #allocation1 [shape = 'u32[72,128]{1,0:T(1,128)}', space=vmem, size = 0x9000, scoped, tag = 'internal scratch']
  %s0 = inlined_call_operand.hbm [shape: bf16[16,32], index: 0, kind: input, shape index: {}]
  %s1 = inlined_call_operand.hbm [shape: bf16[32,128], index: 1, kind: input, shape index: {}]
  %s2 = inlined_call_operand.vmem [shape: f32[1,128], index: 2, kind: input, shape index: {}]
  %s3 = inlined_call_operand.hbm [shape: f32[128,128], index: 3, kind: input, shape index: {}]
  %s4 = inlined_call_operand.vmem [shape: f32[1,128], index: 4, kind: input, shape index: {}]
  %s5 = inlined_call_operand.hbm [shape: f32[16,128], index: 5, kind: output, shape index: {}]
  %s6 = sld [smem:[#allocation0]]
  $region42: #{tpu_custom_call.1} parent=0
    _
  %s8 = ssub.s32 1, %s6
  %s9 = scalar_select 0, %s8, %s6
  $region1: #{tpu_custom_call.1} parent=0
    #allocation2 [shape = 'u8[4096]{0}', space=vmem, size = 0x1000, scoped, tag = 'input window, operand 0, single buffered']
    #allocation3 [shape = 's32[1]{0}', space=sflag, size = 0x4, scoped, tag = 'scoped memory for tpu_custom_call.1']
    #allocation4 [shape = 's32[1]{0}', space=sflag, size = 0x4, scoped, tag = 'scoped memory for tpu_custom_call.1']
    #allocation5 [shape = 'u8[8192]{0}', space=vmem, size = 0x2000, scoped, tag = 'input window, operand 1, single buffered']
    #allocation6 [shape = 's32[1]{0}', space=sflag, size = 0x4, scoped, tag = 'scoped memory for tpu_custom_call.1']
    #allocation7 [shape = 'u8[65536]{0}', space=vmem, size = 0x10000, scoped, tag = 'input window, operand 3, single buffered']
    #allocation8 [shape = 'u8[8192]{0}', space=vmem, size = 0x2000, scoped, tag = 'output window, operand 0, single buffered']
    %10 = vsyncpa [#allocation3], 0
    %11 = vsyncpa [#allocation6], 0
    %12 = vsyncpa [#allocation4], 0
    // Predicated region
    $region2: #{tpu_custom_call.1} parent=1 // pred_check
      _
    $region3: #{tpu_custom_call.1} parent=1 // pred_check_branch
      %14 = sbr.rel (0) target = $region5
    $region4: #{tpu_custom_call.1} parent=1 // pred_region
      %16 = vsyncadd [#allocation3], 0
      %s17 = sshll.u32 %s0, 4
      %s18 = int_to_ptr.hbm [resolvable:$true] %s17
      %s19 = sshll.u32 [#allocation2], 4
      %s20 = int_to_ptr.vmem [resolvable:$true] %s19
      %25 = dma.hbm_to_vmem [thread:$0]  %s18, 128, %s20, [#allocation3], 64, 64, 4
    $region5: #{tpu_custom_call.1} parent=1 // pred_fallthru
      _
    // Predicated region
    $region6: #{tpu_custom_call.1} parent=1 // pred_check
      _
    $region7: #{tpu_custom_call.1} parent=1 // pred_check_branch
      %27 = sbr.rel (0) target = $region9
    $region8: #{tpu_custom_call.1} parent=1 // pred_region
      %29 = vsyncadd [#allocation6], 0
      %s30 = sshll.u32 %s1, 4
      %s31 = int_to_ptr.hbm [resolvable:$true] %s30
      %s32 = sshll.u32 [#allocation5], 4
      %s33 = int_to_ptr.vmem [resolvable:$true] %s32
      %38 = dma.hbm_to_vmem [thread:$0]  %s31, 256, %s33, [#allocation6], 64, 64, 4
    $region9: #{tpu_custom_call.1} parent=1 // pred_fallthru
      _
    // Predicated region
    $region10: #{tpu_custom_call.1} parent=1 // pred_check
      _
    $region11: #{tpu_custom_call.1} parent=1 // pred_check_branch
      %40 = sbr.rel (0) target = $region13
    $region12: #{tpu_custom_call.1} parent=1 // pred_region
      _
    $region13: #{tpu_custom_call.1} parent=1 // pred_fallthru
      _
    // Predicated region
    $region14: #{tpu_custom_call.1} parent=1 // pred_check
      _
    $region15: #{tpu_custom_call.1} parent=1 // pred_check_branch
      %42 = sbr.rel (0) target = $region17
    $region16: #{tpu_custom_call.1} parent=1 // pred_region
      %44 = vsyncadd [#allocation6], 0
      %s45 = sshll.u32 %s3, 4
      %s46 = int_to_ptr.hbm [resolvable:$true] %s45
      %s47 = sshll.u32 [#allocation7], 4
      %s48 = int_to_ptr.vmem [resolvable:$true] %s47
      %53 = dma.hbm_to_vmem [thread:$0]  %s46, 2048, %s48, [#allocation6], 128, 128, 8
    $region17: #{tpu_custom_call.1} parent=1 // pred_fallthru
      _
    // Predicated region
    $region18: #{tpu_custom_call.1} parent=1 // pred_check
      _
    $region19: #{tpu_custom_call.1} parent=1 // pred_check_branch
      %55 = sbr.rel (0) target = $region21
    $region20: #{tpu_custom_call.1} parent=1 // pred_region
      _
    $region21: #{tpu_custom_call.1} parent=1 // pred_fallthru
      _
    // Predicated region
    $region22: #{tpu_custom_call.1} parent=1 // pred_check
      _
    $region23: #{tpu_custom_call.1} parent=1 // pred_check_branch
      %57 = sbr.rel (0) target = $region25
    $region24: #{tpu_custom_call.1} parent=1 // pred_region
      %59 = dma.done [#allocation3], 128
    $region25: #{tpu_custom_call.1} parent=1 // pred_fallthru
      _
    // Predicated region
    $region26: #{tpu_custom_call.1} parent=1 // pred_check
      _
    $region27: #{tpu_custom_call.1} parent=1 // pred_check_branch
      %61 = sbr.rel (0) target = $region29
    $region28: #{tpu_custom_call.1} parent=1 // pred_region
      %63 = dma.done [#allocation6], 256
    $region29: #{tpu_custom_call.1} parent=1 // pred_fallthru
      _
    // Predicated region
    $region30: #{tpu_custom_call.1} parent=1 // pred_check
      _
    $region31: #{tpu_custom_call.1} parent=1 // pred_check_branch
      %65 = sbr.rel (0) target = $region33
    $region32: #{tpu_custom_call.1} parent=1 // pred_region
      %67 = dma.done [#allocation6], 2048
    $region33: #{tpu_custom_call.1} parent=1 // pred_fallthru
      _
    %v69 = vld [vmem:[#allocation2] sm:$0xf]
    %v70 = vld [vmem:[#allocation2 + $0x4] sm:$0xf]
    %v71 = vld [vmem:[#allocation5] sm:$0xf]
    %v72 = vld [vmem:[#allocation5 + $0x4] sm:$0xf]
    %v73 = vld [vmem:[#allocation5 + $0x8] sm:$0xf]
    %v74 = vld [vmem:[#allocation5 + $0xc] sm:$0xf]
    %v75 = vld [vmem:[%s2] sm:$0x1]
    %v77 = vperm.slane %v75, 0
    %v81 = vunpack.c.l.b16 %v69
    %v82 = vunpack.c.l.b16 %v70
    %v83 = vpack.c.b16 %v82, %v81
    %v88 = vunpack.c.l.b16 %v71
    %v89 = vunpack.c.l.b16 %v72
    %v90 = vunpack.c.l.b16 %v73
    %v91 = vunpack.c.l.b16 %v74
    %v92 = vpack.c.b16 %v89, %v88
    %v93 = vpack.c.b16 %v91, %v90
    %vm96 = vcmask 261120
    %v98 = vsel %vm96, %v83, 0
    %100 = vmatpush.bf16.msra.mxu0 0
    %101 = vmatpush.bf16.msra.mxu0 0
    %102 = vmatpush.bf16.msra.mxu0 0
    %103 = vmatpush.bf16.msra.mxu0 0
    %104 = vmatpush.bf16.msra.mxu0 0
    %105 = vmatpush.bf16.msra.mxu0 0
    %106 = vmatpush.bf16.msra.mxu0 %v93
    %107 = vmatpush.bf16.msra.mxu0 %v92
    %108 = vmatmul.bf16.gmra.mxu0 %v98
    %v109 = vpop.f32.mrf.mxu0
    %v110 = vadd.f32 %v77, %v109
    %v111 = vpop.f32.mrf.mxu0
    %v112 = vadd.f32 %v77, %v111
    %113 = vdwg.mxu0
    %v114 = vmax.f32 %v110, 0.0
    %v115 = vmax.f32 %v112, 0.0
    %v116 = vld [vmem:[#allocation7] sm:$0xff]
    %v117 = vld [vmem:[#allocation7 + $0x8] sm:$0xff]
    %v118 = vld [vmem:[#allocation7 + $0x10] sm:$0xff]
    %v119 = vld [vmem:[#allocation7 + $0x18] sm:$0xff]
    %v120 = vld [vmem:[#allocation7 + $0x20] sm:$0xff]
    %v121 = vld [vmem:[#allocation7 + $0x28] sm:$0xff]
    %v122 = vld [vmem:[#allocation7 + $0x30] sm:$0xff]
    %v123 = vld [vmem:[#allocation7 + $0x38] sm:$0xff]
    %v124 = vld [vmem:[#allocation7 + $0x40] sm:$0xff]
    %v125 = vld [vmem:[#allocation7 + $0x48] sm:$0xff]
    %v126 = vld [vmem:[#allocation7 + $0x50] sm:$0xff]
    %v127 = vld [vmem:[#allocation7 + $0x58] sm:$0xff]
    %v128 = vld [vmem:[#allocation7 + $0x60] sm:$0xff]
    %v129 = vld [vmem:[#allocation7 + $0x68] sm:$0xff]
    %v130 = vld [vmem:[#allocation7 + $0x70] sm:$0xff]
    %v131 = vld [vmem:[#allocation7 + $0x78] sm:$0xff]
    %v132 = vld [vmem:[%s4] sm:$0x1]
    %v134 = vperm.slane %v132, 0
    %136 = vmatpush.msra.mxu0 %v131
    %137 = vmatpush.msra.mxu0 %v130
    %138 = vmatpush.msra.mxu0 %v129
    %139 = vmatpush.msra.mxu0 %v128
    %140 = vmatpush.msra.mxu0 %v127
    %141 = vmatpush.msra.mxu0 %v126
    %142 = vmatpush.msra.mxu0 %v125
    %143 = vmatpush.msra.mxu0 %v124
    %144 = vmatpush.msra.mxu0 %v123
    %145 = vmatpush.msra.mxu0 %v122
    %146 = vmatpush.msra.mxu0 %v121
    %147 = vmatpush.msra.mxu0 %v120
    %148 = vmatpush.msra.mxu0 %v119
    %149 = vmatpush.msra.mxu0 %v118
    %150 = vmatpush.msra.mxu0 %v117
    %151 = vmatpush.msra.mxu0 %v116
    %152 = vmatmul.f32.gmra.mxu0 %v114
    %v153 = vpop.f32.mrf.mxu0
    %v154 = vadd.f32 %v134, %v153
    %155 = vmatmul.f32.gmra.mxu0 %v115
    %v156 = vpop.f32.mrf.mxu0
    %v157 = vadd.f32 %v134, %v156
    %158 = vdwg.mxu0
    %159 = vst [vmem:[#allocation8] sm:$0xff] %v154
    %160 = vst [vmem:[#allocation8 + $0x8] sm:$0xff] %v157
    // Predicated region
    $region34: #{tpu_custom_call.1} parent=1 // pred_check
      _
    $region35: #{tpu_custom_call.1} parent=1 // pred_check_branch
      %162 = sbr.rel (0) target = $region37
    $region36: #{tpu_custom_call.1} parent=1 // pred_region
      %164 = vsyncadd [#allocation4], 0
      %s165 = sshll.u32 [#allocation8], 4
      %s166 = int_to_ptr.vmem [resolvable:$true] %s165
      %s167 = sshll.u32 %s5, 4
      %s168 = int_to_ptr.hbm [resolvable:$true] %s167
      %173 = dma.vmem_to_hbm [thread:$0]  %s166, 256, %s168, [#allocation4], 128, 128, 8
    $region37: #{tpu_custom_call.1} parent=1 // pred_fallthru
      _
    // Predicated region
    $region38: #{tpu_custom_call.1} parent=1 // pred_check
      _
    $region39: #{tpu_custom_call.1} parent=1 // pred_check_branch
      %175 = sbr.rel (0) target = $region41
    $region40: #{tpu_custom_call.1} parent=1 // pred_region
      %177 = dma.done [#allocation4], 256
    $region41: #{tpu_custom_call.1} parent=1 // pred_fallthru
      _
    %178 = vsyncpa [#allocation3], 1
    %179 = vsyncpa [#allocation6], 1
    %180 = vsyncpa [#allocation4], 1

</llo_original>
